<compile_context>
chip_gen: v6e
topology: v6e:2x2x1
jax: 0.10.0
libtpu: 0.0.40
codegen_flags: <defaults>
</compile_context>

<pallas_src>
import functools

import jax
import jax.numpy as jnp
from jax.experimental import pallas as pl
from jax.experimental.pallas import tpu as pltpu

M = N = K = 128  # Subgraph2 operates on 128x128 inputs


def _matmul_kernel(a_ref, b_ref, o_ref, *, cast_bf16: bool = False):
    """o = a @ b with f32 MXU accumulation.

    Used both ungridded (refs are the full (128, 128) arrays in VMEM) and
    gridded over a batch axis (leading dim squeezed away, refs still (128, 128)).
    Output is lane-dense (full 128-wide) -> unmasked vector stores.
    """
    a = a_ref[...]
    b = b_ref[...]
    if cast_bf16:
        # Single-pass MXU + half the input bytes; accumulation stays f32.
        a = a.astype(jnp.bfloat16)
        b = b.astype(jnp.bfloat16)
    o_ref[...] = jnp.dot(a, b, preferred_element_type=jnp.float32).astype(o_ref.dtype)


def _cost(batch: int = 1) -> pl.CostEstimate:
    return pl.CostEstimate(
        flops=batch * 2 * M * N * K,
        transcendentals=0,
        bytes_accessed=batch * (M * K + K * N + M * N) * 4,
    )


def subgraph2_forward(input1, input2, *, use_bf16_inputs: bool = False):
    """Pallas equivalent of Subgraph2.forward for a single (128,128) pair.

    Single invocation, no grid: the whole working set (192 KiB) is DMA'd to
    VMEM once; a grid would only add per-step overhead here.
    """
    assert input1.shape == (M, K) and input2.shape == (K, N)
    kernel = functools.partial(_matmul_kernel, cast_bf16=use_bf16_inputs)
    return pl.pallas_call(
        kernel,
        out_shape=jax.ShapeDtypeStruct((M, N), input1.dtype),
        in_specs=[
            pl.BlockSpec(memory_space=pltpu.MemorySpace.VMEM),
            pl.BlockSpec(memory_space=pltpu.MemorySpace.VMEM),
        ],
        out_specs=pl.BlockSpec(memory_space=pltpu.MemorySpace.VMEM),
        cost_estimate=_cost(1),
    )(input1, input2)


def subgraph2_forward_batched(input1_b, input2_b, *, use_bf16_inputs: bool = False):
    """B independent Subgraph2 instances fused into ONE pallas_call.

    One grid step per instance (BlockSpec (1,128,128), leading dim squeezed),
    batch axis marked "parallel" so Mosaic can shard it across the two
    TensorCores on v7x and double-buffer the per-instance DMAs.
    """
    B = input1_b.shape[0]
    assert input1_b.shape == (B, M, K) and input2_b.shape == (B, K, N)
    kernel = functools.partial(_matmul_kernel, cast_bf16=use_bf16_inputs)
    return pl.pallas_call(
        kernel,
        out_shape=jax.ShapeDtypeStruct((B, M, N), input1_b.dtype),
        grid_spec=pltpu.PrefetchScalarGridSpec(
            num_scalar_prefetch=0,
            grid=(B,),
            in_specs=[
                pl.BlockSpec((None, M, K), lambda b: (b, 0, 0)),
                pl.BlockSpec((None, K, N), lambda b: (b, 0, 0)),
            ],
            out_specs=pl.BlockSpec((None, M, N), lambda b: (b, 0, 0)),
        ),
        compiler_params=pltpu.CompilerParams(
            dimension_semantics=("parallel",),
        ),
        cost_estimate=_cost(B),
    )(input1_b, input2_b)


if __name__ == "__main__":
    key = jax.random.PRNGKey(0)
    k1, k2, k3, k4 = jax.random.split(key, 4)

    # Shapes implied by the module: torch.randn(128, 128) for both inputs.
    input1 = jax.random.normal(k1, (M, K), dtype=jnp.float32)
    input2 = jax.random.normal(k2, (K, N), dtype=jnp.float32)

    out = jax.block_until_ready(subgraph2_forward(input1, input2))
    ref = jnp.dot(input1, input2, preferred_element_type=jnp.float32)
    assert out.shape == (M, N)
    # Tolerance covers MXU default-precision (bf16-pass) lowering differences
    # between the Pallas dot and the XLA reference dot.
    assert jnp.allclose(out, ref, atol=1e-2, rtol=1e-2)

    # Batched path: two Subgraph2 instances amortized into a single call.
    B = 2
    a_b = jax.random.normal(k3, (B, M, K), dtype=jnp.float32)
    b_b = jax.random.normal(k4, (B, K, N), dtype=jnp.float32)
    out_b = jax.block_until_ready(subgraph2_forward_batched(a_b, b_b))
    ref_b = jnp.einsum("bij,bjk->bik", a_b, b_b)
    assert out_b.shape == (B, M, N)
    assert jnp.allclose(out_b, ref_b, atol=1e-2, rtol=1e-2)

    print("KERNEL_OK")
</pallas_src>

<mosaic_0001>
module attributes {stable_mosaic.version = 11 : i64} {
  func.func @_matmul_kernel(%arg0: memref<128x128xf32, #tpu.memory_space<vmem>>, %arg1: memref<128x128xf32, #tpu.memory_space<vmem>>, %arg2: memref<128x128xf32, #tpu.memory_space<vmem>>) attributes {dimension_semantics = [], scalar_prefetch = 0 : i64, scratch_operands = 0 : i64, tpu.core_type = #tpu.core_type<tc>} {
    %c0 = arith.constant 0 : index
    %c0_0 = arith.constant 0 : index
    %0 = vector.load %arg0[%c0, %c0_0] : memref<128x128xf32, #tpu.memory_space<vmem>>, vector<128x128xf32>
    %c0_1 = arith.constant 0 : index
    %c0_2 = arith.constant 0 : index
    %1 = vector.load %arg1[%c0_1, %c0_2] : memref<128x128xf32, #tpu.memory_space<vmem>>, vector<128x128xf32>
    %cst = arith.constant dense<0.000000e+00> : vector<128x128xf32>
    %2 = tpu.matmul %0, %1, %cst {dimension_numbers = #tpu.dot_dimension_numbers<[1], [0], [0], [1], [0, 0, 1, 1], [], []>} : vector<128x128xf32>, vector<128x128xf32>, vector<128x128xf32> -> vector<128x128xf32>
    %c0_3 = arith.constant 0 : index
    %c0_4 = arith.constant 0 : index
    %3 = vector.load %arg2[%c0_3, %c0_4] : memref<128x128xf32, #tpu.memory_space<vmem>>, vector<128x128xf32>
    tpu.vector_store %arg2[%c0_3, %c0_4], %2 {strides = array<i32>} : memref<128x128xf32, #tpu.memory_space<vmem>>, vector<128x128xf32>,
    return
  }
}

</mosaic_0001>

<llo_original>
// kernel: tpu_custom_call.1
$region0: #{tpu_custom_call.1}
  #allocation0 [shape = 'u32[]', space=smem, size = 0x4, offset = 0x4, fixed_abs, tag = 'smem constant byte address 0x4 - core index']
  #allocation1 [shape = 'u32[144,128]{1,0:T(1,128)}', space=vmem, size = 0x12000, scoped, tag = 'internal scratch']
  %s0 = inlined_call_operand.hbm [shape: f32[128,128], index: 0, kind: input, shape index: {}]
  %s1 = inlined_call_operand.hbm [shape: f32[128,128], index: 1, kind: input, shape index: {}]
  %s2 = inlined_call_operand.hbm [shape: f32[128,128], index: 2, kind: output, shape index: {}]
  %s3 = sld [smem:[#allocation0]]
  $region26: #{tpu_custom_call.1} parent=0
    _
  %s5 = ssub.s32 1, %s3
  %s6 = scalar_select 0, %s5, %s3
  $region1: #{tpu_custom_call.1} parent=0
    #allocation2 [shape = 'u8[65536]{0}', space=vmem, size = 0x10000, scoped, tag = 'input window, operand 0, single buffered']
    #allocation3 [shape = 's32[1]{0}', space=sflag, size = 0x4, scoped, tag = 'scoped memory for tpu_custom_call.1']
    #allocation4 [shape = 's32[1]{0}', space=sflag, size = 0x4, scoped, tag = 'scoped memory for tpu_custom_call.1']
    #allocation5 [shape = 'u8[65536]{0}', space=vmem, size = 0x10000, scoped, tag = 'input window, operand 1, single buffered']
    #allocation6 [shape = 's32[1]{0}', space=sflag, size = 0x4, scoped, tag = 'scoped memory for tpu_custom_call.1']
    #allocation7 [shape = 'u8[65536]{0}', space=vmem, size = 0x10000, scoped, tag = 'output window, operand 0, single buffered']
    %7 = vsyncpa [#allocation3], 0
    %8 = vsyncpa [#allocation6], 0
    %9 = vsyncpa [#allocation4], 0
    // Predicated region
    $region2: #{tpu_custom_call.1} parent=1 // pred_check
      _
    $region3: #{tpu_custom_call.1} parent=1 // pred_check_branch
      %11 = sbr.rel (0) target = $region5
    $region4: #{tpu_custom_call.1} parent=1 // pred_region
      %s13 = ssub.s32 2048, 2048
      %14 = vsyncadd [#allocation3], %s13
      %s15 = sshll.u32 [#allocation2], 4
      %s16 = int_to_ptr.vmem [resolvable:$true] %s15
      %21 = dma.hbm_to_vmem [thread:$0]  %s0, 2048, %s16, [#allocation3], 128, 128, 8
    $region5: #{tpu_custom_call.1} parent=1 // pred_fallthru
      _
    // Predicated region
    $region6: #{tpu_custom_call.1} parent=1 // pred_check
      _
    $region7: #{tpu_custom_call.1} parent=1 // pred_check_branch
      %23 = sbr.rel (0) target = $region9
    $region8: #{tpu_custom_call.1} parent=1 // pred_region
      %s25 = ssub.s32 2048, 2048
      %26 = vsyncadd [#allocation6], %s25
      %s27 = sshll.u32 [#allocation5], 4
      %s28 = int_to_ptr.vmem [resolvable:$true] %s27
      %33 = dma.hbm_to_vmem [thread:$0]  %s1, 2048, %s28, [#allocation6], 128, 128, 8
    $region9: #{tpu_custom_call.1} parent=1 // pred_fallthru
      _
    // Predicated region
    $region10: #{tpu_custom_call.1} parent=1 // pred_check
      _
    $region11: #{tpu_custom_call.1} parent=1 // pred_check_branch
      %35 = sbr.rel (0) target = $region13
    $region12: #{tpu_custom_call.1} parent=1 // pred_region
      %36 = dma.done [#allocation3], 2048
    $region13: #{tpu_custom_call.1} parent=1 // pred_fallthru
      _
    // Predicated region
    $region14: #{tpu_custom_call.1} parent=1 // pred_check
      _
    $region15: #{tpu_custom_call.1} parent=1 // pred_check_branch
      %38 = sbr.rel (0) target = $region17
    $region16: #{tpu_custom_call.1} parent=1 // pred_region
      %39 = dma.done [#allocation6], 2048
    $region17: #{tpu_custom_call.1} parent=1 // pred_fallthru
      _
    %v40 = vld [vmem:[#allocation2] sm:$0xff]
    %v41 = vld [vmem:[#allocation2 + $0x8] sm:$0xff]
    %v42 = vld [vmem:[#allocation2 + $0x10] sm:$0xff]
    %v43 = vld [vmem:[#allocation2 + $0x18] sm:$0xff]
    %v44 = vld [vmem:[#allocation2 + $0x20] sm:$0xff]
    %v45 = vld [vmem:[#allocation2 + $0x28] sm:$0xff]
    %v46 = vld [vmem:[#allocation2 + $0x30] sm:$0xff]
    %v47 = vld [vmem:[#allocation2 + $0x38] sm:$0xff]
    %v48 = vld [vmem:[#allocation2 + $0x40] sm:$0xff]
    %v49 = vld [vmem:[#allocation2 + $0x48] sm:$0xff]
    %v50 = vld [vmem:[#allocation2 + $0x50] sm:$0xff]
    %v51 = vld [vmem:[#allocation2 + $0x58] sm:$0xff]
    %v52 = vld [vmem:[#allocation2 + $0x60] sm:$0xff]
    %v53 = vld [vmem:[#allocation2 + $0x68] sm:$0xff]
    %v54 = vld [vmem:[#allocation2 + $0x70] sm:$0xff]
    %v55 = vld [vmem:[#allocation2 + $0x78] sm:$0xff]
    %v56 = vld [vmem:[#allocation5] sm:$0xff]
    %v57 = vld [vmem:[#allocation5 + $0x8] sm:$0xff]
    %v58 = vld [vmem:[#allocation5 + $0x10] sm:$0xff]
    %v59 = vld [vmem:[#allocation5 + $0x18] sm:$0xff]
    %v60 = vld [vmem:[#allocation5 + $0x20] sm:$0xff]
    %v61 = vld [vmem:[#allocation5 + $0x28] sm:$0xff]
    %v62 = vld [vmem:[#allocation5 + $0x30] sm:$0xff]
    %v63 = vld [vmem:[#allocation5 + $0x38] sm:$0xff]
    %v64 = vld [vmem:[#allocation5 + $0x40] sm:$0xff]
    %v65 = vld [vmem:[#allocation5 + $0x48] sm:$0xff]
    %v66 = vld [vmem:[#allocation5 + $0x50] sm:$0xff]
    %v67 = vld [vmem:[#allocation5 + $0x58] sm:$0xff]
    %v68 = vld [vmem:[#allocation5 + $0x60] sm:$0xff]
    %v69 = vld [vmem:[#allocation5 + $0x68] sm:$0xff]
    %v70 = vld [vmem:[#allocation5 + $0x70] sm:$0xff]
    %v71 = vld [vmem:[#allocation5 + $0x78] sm:$0xff]
    %72 = vmatprep.subr.mxu0 0.0
    %73 = vmatpush1.msra.mxu0 %v71
    %74 = vmatprep.subr.mxu0 0.0
    %75 = vmatpush1.msra.mxu0 %v70
    %76 = vmatprep.subr.mxu0 0.0
    %77 = vmatpush1.msra.mxu0 %v69
    %78 = vmatprep.subr.mxu0 0.0
    %79 = vmatpush1.msra.mxu0 %v68
    %80 = vmatprep.subr.mxu0 0.0
    %81 = vmatpush1.msra.mxu0 %v67
    %82 = vmatprep.subr.mxu0 0.0
    %83 = vmatpush1.msra.mxu0 %v66
    %84 = vmatprep.subr.mxu0 0.0
    %85 = vmatpush1.msra.mxu0 %v65
    %86 = vmatprep.subr.mxu0 0.0
    %87 = vmatpush1.msra.mxu0 %v64
    %88 = vmatprep.subr.mxu0 0.0
    %89 = vmatpush1.msra.mxu0 %v63
    %90 = vmatprep.subr.mxu0 0.0
    %91 = vmatpush1.msra.mxu0 %v62
    %92 = vmatprep.subr.mxu0 0.0
    %93 = vmatpush1.msra.mxu0 %v61
    %94 = vmatprep.subr.mxu0 0.0
    %95 = vmatpush1.msra.mxu0 %v60
    %96 = vmatprep.subr.mxu0 0.0
    %97 = vmatpush1.msra.mxu0 %v59
    %98 = vmatprep.subr.mxu0 0.0
    %99 = vmatpush1.msra.mxu0 %v58
    %100 = vmatprep.subr.mxu0 0.0
    %101 = vmatpush1.msra.mxu0 %v57
    %102 = vmatprep.subr.mxu0 0.0
    %103 = vmatpush1.msra.mxu0 %v56
    %104 = vmatprep.subr.mxu0 0.0
    %105 = vmatpush2.msra.mxu0 0.0
    %106 = vmatprep.subr.mxu0 0.0
    %107 = vmatpush2.msra.mxu0 0.0
    %108 = vmatprep.subr.mxu0 0.0
    %109 = vmatpush2.msra.mxu0 0.0
    %110 = vmatprep.subr.mxu0 0.0
    %111 = vmatpush2.msra.mxu0 0.0
    %112 = vmatprep.subr.mxu0 0.0
    %113 = vmatpush2.msra.mxu0 0.0
    %114 = vmatprep.subr.mxu0 0.0
    %115 = vmatpush2.msra.mxu0 0.0
    %116 = vmatprep.subr.mxu0 0.0
    %117 = vmatpush2.msra.mxu0 0.0
    %118 = vmatprep.subr.mxu0 0.0
    %119 = vmatpush2.msra.mxu0 0.0
    %120 = vmatprep.subr.mxu0 0.0
    %121 = vmatpush2.msra.mxu0 0.0
    %122 = vmatprep.subr.mxu0 0.0
    %123 = vmatpush2.msra.mxu0 0.0
    %124 = vmatprep.subr.mxu0 0.0
    %125 = vmatpush2.msra.mxu0 0.0
    %126 = vmatprep.subr.mxu0 0.0
    %127 = vmatpush2.msra.mxu0 0.0
    %128 = vmatprep.subr.mxu0 0.0
    %129 = vmatpush2.msra.mxu0 0.0
    %130 = vmatprep.subr.mxu0 0.0
    %131 = vmatpush2.msra.mxu0 0.0
    %132 = vmatprep.subr.mxu0 0.0
    %133 = vmatpush2.msra.mxu0 0.0
    %134 = vmatprep.subr.mxu0 0.0
    %135 = vmatpush2.msra.mxu0 0.0
    %136 = vmatprep.mubr.f32.mxu0 0.0
    %137 = vmatmul.mubr.f32.gmra.mxu0 %v40
    %v138 = vpop.f32.mrf.mxu0
    %v139 = vadd.f32 0.0, %v138
    %v140 = vpop.f32.mrf.mxu0
    %141 = vmatprep.mubr.f32.mxu0 0.0
    %142 = vmatmul.mubr.f32.gmra.mxu0 %v41
    %v143 = vpop.f32.mrf.mxu0
    %v144 = vadd.f32 0.0, %v143
    %v145 = vpop.f32.mrf.mxu0
    %146 = vmatprep.mubr.f32.mxu0 0.0
    %147 = vmatmul.mubr.f32.gmra.mxu0 %v42
    %v148 = vpop.f32.mrf.mxu0
    %v149 = vadd.f32 0.0, %v148
    %v150 = vpop.f32.mrf.mxu0
    %151 = vmatprep.mubr.f32.mxu0 0.0
    %152 = vmatmul.mubr.f32.gmra.mxu0 %v43
    %v153 = vpop.f32.mrf.mxu0
    %v154 = vadd.f32 0.0, %v153
    %v155 = vpop.f32.mrf.mxu0
    %156 = vmatprep.mubr.f32.mxu0 0.0
    %157 = vmatmul.mubr.f32.gmra.mxu0 %v44
    %v158 = vpop.f32.mrf.mxu0
    %v159 = vadd.f32 0.0, %v158
    %v160 = vpop.f32.mrf.mxu0
    %161 = vmatprep.mubr.f32.mxu0 0.0
    %162 = vmatmul.mubr.f32.gmra.mxu0 %v45
    %v163 = vpop.f32.mrf.mxu0
    %v164 = vadd.f32 0.0, %v163
    %v165 = vpop.f32.mrf.mxu0
    %166 = vmatprep.mubr.f32.mxu0 0.0
    %167 = vmatmul.mubr.f32.gmra.mxu0 %v46
    %v168 = vpop.f32.mrf.mxu0
    %v169 = vadd.f32 0.0, %v168
    %v170 = vpop.f32.mrf.mxu0
    %171 = vmatprep.mubr.f32.mxu0 0.0
    %172 = vmatmul.mubr.f32.gmra.mxu0 %v47
    %v173 = vpop.f32.mrf.mxu0
    %v174 = vadd.f32 0.0, %v173
    %v175 = vpop.f32.mrf.mxu0
    %176 = vmatprep.mubr.f32.mxu0 0.0
    %177 = vmatmul.mubr.f32.gmra.mxu0 %v48
    %v178 = vpop.f32.mrf.mxu0
    %v179 = vadd.f32 0.0, %v178
    %v180 = vpop.f32.mrf.mxu0
    %181 = vmatprep.mubr.f32.mxu0 0.0
    %182 = vmatmul.mubr.f32.gmra.mxu0 %v49
    %v183 = vpop.f32.mrf.mxu0
    %v184 = vadd.f32 0.0, %v183
    %v185 = vpop.f32.mrf.mxu0
    %186 = vmatprep.mubr.f32.mxu0 0.0
    %187 = vmatmul.mubr.f32.gmra.mxu0 %v50
    %v188 = vpop.f32.mrf.mxu0
    %v189 = vadd.f32 0.0, %v188
    %v190 = vpop.f32.mrf.mxu0
    %191 = vmatprep.mubr.f32.mxu0 0.0
    %192 = vmatmul.mubr.f32.gmra.mxu0 %v51
    %v193 = vpop.f32.mrf.mxu0
    %v194 = vadd.f32 0.0, %v193
    %v195 = vpop.f32.mrf.mxu0
    %196 = vmatprep.mubr.f32.mxu0 0.0
    %197 = vmatmul.mubr.f32.gmra.mxu0 %v52
    %v198 = vpop.f32.mrf.mxu0
    %v199 = vadd.f32 0.0, %v198
    %v200 = vpop.f32.mrf.mxu0
    %201 = vmatprep.mubr.f32.mxu0 0.0
    %202 = vmatmul.mubr.f32.gmra.mxu0 %v53
    %v203 = vpop.f32.mrf.mxu0
    %v204 = vadd.f32 0.0, %v203
    %v205 = vpop.f32.mrf.mxu0
    %206 = vmatprep.mubr.f32.mxu0 0.0
    %207 = vmatmul.mubr.f32.gmra.mxu0 %v54
    %v208 = vpop.f32.mrf.mxu0
    %v209 = vadd.f32 0.0, %v208
    %v210 = vpop.f32.mrf.mxu0
    %211 = vmatprep.mubr.f32.mxu0 0.0
    %212 = vmatmul.mubr.f32.gmra.mxu0 %v55
    %v213 = vpop.f32.mrf.mxu0
    %v214 = vadd.f32 0.0, %v213
    %v215 = vpop.f32.mrf.mxu0
    %216 = vdwg.mxu0
    %217 = vst [vmem:[#allocation7] sm:$0xff] %v139
    %218 = vst [vmem:[#allocation7 + $0x8] sm:$0xff] %v144
    %219 = vst [vmem:[#allocation7 + $0x10] sm:$0xff] %v149
    %220 = vst [vmem:[#allocation7 + $0x18] sm:$0xff] %v154
    %221 = vst [vmem:[#allocation7 + $0x20] sm:$0xff] %v159
    %222 = vst [vmem:[#allocation7 + $0x28] sm:$0xff] %v164
    %223 = vst [vmem:[#allocation7 + $0x30] sm:$0xff] %v169
    %224 = vst [vmem:[#allocation7 + $0x38] sm:$0xff] %v174
    %225 = vst [vmem:[#allocation7 + $0x40] sm:$0xff] %v179
    %226 = vst [vmem:[#allocation7 + $0x48] sm:$0xff] %v184
    %227 = vst [vmem:[#allocation7 + $0x50] sm:$0xff] %v189
    %228 = vst [vmem:[#allocation7 + $0x58] sm:$0xff] %v194
    %229 = vst [vmem:[#allocation7 + $0x60] sm:$0xff] %v199
    %230 = vst [vmem:[#allocation7 + $0x68] sm:$0xff] %v204
    %231 = vst [vmem:[#allocation7 + $0x70] sm:$0xff] %v209
    %232 = vst [vmem:[#allocation7 + $0x78] sm:$0xff] %v214
    // Predicated region
    $region18: #{tpu_custom_call.1} parent=1 // pred_check
      _
    $region19: #{tpu_custom_call.1} parent=1 // pred_check_branch
      %234 = sbr.rel (0) target = $region21
    $region20: #{tpu_custom_call.1} parent=1 // pred_region
      %s236 = ssub.s32 2048, 2048
      %237 = vsyncadd [#allocation4], %s236
      %s238 = sshll.u32 [#allocation7], 4
      %s239 = int_to_ptr.vmem [resolvable:$true] %s238
      %244 = dma.vmem_to_hbm [thread:$0]  %s239, 2048, %s2, [#allocation4], 128, 128, 8
    $region21: #{tpu_custom_call.1} parent=1 // pred_fallthru
      _
    // Predicated region
    $region22: #{tpu_custom_call.1} parent=1 // pred_check
      _
    $region23: #{tpu_custom_call.1} parent=1 // pred_check_branch
      %246 = sbr.rel (0) target = $region25
    $region24: #{tpu_custom_call.1} parent=1 // pred_region
      %247 = dma.done [#allocation4], 2048
    $region25: #{tpu_custom_call.1} parent=1 // pred_fallthru
      _
    %248 = vsyncpa [#allocation3], 1
    %249 = vsyncpa [#allocation6], 1
    %250 = vsyncpa [#allocation4], 1

</llo_original>
